<compile_context>
chip_gen: v7x
topology: tpu7x:2x2x1
jax: 0.10.0
libtpu: 0.0.40
codegen_flags: <defaults>
</compile_context>

<pallas_src>
import math

import jax
import jax.numpy as jnp
from jax.experimental import pallas as pl
from jax.experimental.pallas import tpu as pltpu  # noqa: F401  (TPU backend)

# ------------------------------ model config ---------------------------------
INPUT_DIM = 32     # config.d_model
INNER_DIM = 64     # classification head inner_dim
NUM_CLASSES = 4    # num_classes
# pooler_dropout -> 0.0 (eval-mode identity)


# ------------------------------ Pallas kernel ---------------------------------
def _cls_head_kernel(x_ref, w1_ref, b1_ref, w2_ref, b2_ref, o_ref):
    """Fused: o = tanh(x @ W1 + b1) @ W2 + b2, everything VMEM-resident."""
    x = x_ref[...]
    # dense + bias, f32 accumulation on the MXU
    h = jnp.dot(x, w1_ref[...], preferred_element_type=jnp.float32) + b1_ref[...]
    # tanh goes to the EUP (separate VLIW slot)
    h = jnp.tanh(h)
    # out_proj + bias
    y = jnp.dot(h.astype(w2_ref.dtype), w2_ref[...],
                preferred_element_type=jnp.float32) + b2_ref[...]
    o_ref[...] = y.astype(o_ref.dtype)


# -------------------------------- wrapper -------------------------------------
def bart_classification_head(x, w1, b1, w2, b2):
    """x: (..., INPUT_DIM) -> (..., NUM_CLASSES). Single fused pallas_call."""
    lead_shape = x.shape[:-1]
    M = 1
    for d in lead_shape:
        M *= d
    K = x.shape[-1]
    Ni = w1.shape[1]
    Nc = w2.shape[1]
    x2d = x.reshape(M, K)

    y2d = pl.pallas_call(
        _cls_head_kernel,
        out_shape=jax.ShapeDtypeStruct((M, Nc), x.dtype),
        grid=(1,),
        in_specs=[
            pl.BlockSpec((M, K), lambda i: (0, 0)),
            pl.BlockSpec((K, Ni), lambda i: (0, 0)),
            pl.BlockSpec((1, Ni), lambda i: (0, 0)),
            pl.BlockSpec((Ni, Nc), lambda i: (0, 0)),
            pl.BlockSpec((1, Nc), lambda i: (0, 0)),
        ],
        out_specs=pl.BlockSpec((M, Nc), lambda i: (0, 0)),
    )(x2d, w1, b1, w2, b2)
    return y2d.reshape(*lead_shape, Nc)


# ------------------------------ param init -----------------------------------
def _init_linear(key, din, dout):
    """nn.Linear default init (uniform +/- 1/sqrt(fan_in)); weight stored (din, dout)."""
    kw, kb = jax.random.split(key)
    bound = 1.0 / math.sqrt(din)
    w = jax.random.uniform(kw, (din, dout), jnp.float32, -bound, bound)
    b = jax.random.uniform(kb, (1, dout), jnp.float32, -bound, bound)
    return w, b


# --------------------------------- main ---------------------------------------
if __name__ == "__main__":
    B, T = 2, 8  # batch, seq -> 16 rows (multiple of 8 sublanes)
    key = jax.random.PRNGKey(0)
    kx, k1, k2 = jax.random.split(key, 3)

    x = jax.random.normal(kx, (B, T, INPUT_DIM), jnp.float32)
    dense_w, dense_b = _init_linear(k1, INPUT_DIM, INNER_DIM)
    out_w, out_b = _init_linear(k2, INNER_DIM, NUM_CLASSES)

    # TODO(synk): training-mode dropout (p=pooler_dropout) not modeled; eval-mode
    #             dropout is the identity, matching module.eval() semantics.
    y = bart_classification_head(x, dense_w, dense_b, out_w, out_b)
    y = jax.block_until_ready(y)

    # reference check (pure-JAX) for correctness
    ref = jnp.tanh(x.reshape(-1, INPUT_DIM) @ dense_w + dense_b) @ out_w + out_b
    ref = ref.reshape(B, T, NUM_CLASSES)

    assert y.shape == (B, T, NUM_CLASSES)
    assert bool(jnp.all(jnp.isfinite(y)))
    assert bool(jnp.allclose(y, ref, atol=1e-5, rtol=1e-5))
    print("KERNEL_OK")
</pallas_src>

<mosaic_0001>
module attributes {stable_mosaic.version = 11 : i64} {
  func.func @_cls_head_kernel(%arg0: i32, %arg1: memref<16x32xf32, #tpu.memory_space<vmem>>, %arg2: memref<32x64xf32, #tpu.memory_space<vmem>>, %arg3: memref<1x64xf32, #tpu.memory_space<vmem>>, %arg4: memref<64x4xf32, #tpu.memory_space<vmem>>, %arg5: memref<1x4xf32, #tpu.memory_space<vmem>>, %arg6: memref<16x4xf32, #tpu.memory_space<vmem>>) attributes {dimension_semantics = [#tpu.dimension_semantics<arbitrary>], iteration_bounds = array<i64: 1>, scalar_prefetch = 0 : i64, scratch_operands = 0 : i64, tpu.core_type = #tpu.core_type<tc>, window_params = [{pipeline_mode = #tpu.pipeline_mode<synchronous>, transform_indices = @transform_0, window_bounds = array<i64: 16, 32>}, {pipeline_mode = #tpu.pipeline_mode<synchronous>, transform_indices = @transform_1, window_bounds = array<i64: 32, 64>}, {pipeline_mode = #tpu.pipeline_mode<synchronous>, transform_indices = @transform_2, window_bounds = array<i64: 1, 64>}, {pipeline_mode = #tpu.pipeline_mode<synchronous>, transform_indices = @transform_3, window_bounds = array<i64: 64, 4>}, {pipeline_mode = #tpu.pipeline_mode<synchronous>, transform_indices = @transform_4, window_bounds = array<i64: 1, 4>}, {pipeline_mode = #tpu.pipeline_mode<synchronous>, transform_indices = @transform_5, window_bounds = array<i64: 16, 4>}]} {
    %c0 = arith.constant 0 : index
    %c0_0 = arith.constant 0 : index
    %0 = vector.load %arg1[%c0, %c0_0] : memref<16x32xf32, #tpu.memory_space<vmem>>, vector<16x32xf32>
    %c0_1 = arith.constant 0 : index
    %c0_2 = arith.constant 0 : index
    %1 = vector.load %arg2[%c0_1, %c0_2] : memref<32x64xf32, #tpu.memory_space<vmem>>, vector<32x64xf32>
    %cst = arith.constant dense<0.000000e+00> : vector<16x64xf32>
    %2 = tpu.matmul %0, %1, %cst {dimension_numbers = #tpu.dot_dimension_numbers<[1], [0], [0], [1], [0, 0, 1, 1], [], []>} : vector<16x32xf32>, vector<32x64xf32>, vector<16x64xf32> -> vector<16x64xf32>
    %c0_3 = arith.constant 0 : index
    %c0_4 = arith.constant 0 : index
    %3 = vector.load %arg3[%c0_3, %c0_4] : memref<1x64xf32, #tpu.memory_space<vmem>>, vector<1x64xf32>
    %4 = vector.broadcast %3 : vector<1x64xf32> to vector<16x64xf32>
    %5 = arith.addf %2, %4 : vector<16x64xf32>
    %6 = math.tanh %5 : vector<16x64xf32>
    %c0_5 = arith.constant 0 : index
    %c0_6 = arith.constant 0 : index
    %7 = vector.load %arg4[%c0_5, %c0_6] : memref<64x4xf32, #tpu.memory_space<vmem>>, vector<64x4xf32>
    %cst_7 = arith.constant dense<0.000000e+00> : vector<16x4xf32>
    %8 = tpu.matmul %6, %7, %cst_7 {dimension_numbers = #tpu.dot_dimension_numbers<[1], [0], [0], [1], [0, 0, 1, 1], [], []>} : vector<16x64xf32>, vector<64x4xf32>, vector<16x4xf32> -> vector<16x4xf32>
    %c0_8 = arith.constant 0 : index
    %c0_9 = arith.constant 0 : index
    %9 = vector.load %arg5[%c0_8, %c0_9] : memref<1x4xf32, #tpu.memory_space<vmem>>, vector<1x4xf32>
    %10 = vector.broadcast %9 : vector<1x4xf32> to vector<16x4xf32>
    %11 = arith.addf %8, %10 : vector<16x4xf32>
    %c0_10 = arith.constant 0 : index
    %c0_11 = arith.constant 0 : index
    %12 = vector.load %arg6[%c0_10, %c0_11] : memref<16x4xf32, #tpu.memory_space<vmem>>, vector<16x4xf32>
    tpu.vector_store %arg6[%c0_10, %c0_11], %11 {strides = array<i32>} : memref<16x4xf32, #tpu.memory_space<vmem>>, vector<16x4xf32>,
    return
  }
  func.func @transform_0(%arg0: i32) -> (i32, i32) {
    %c0_i32 = arith.constant 0 : i32
    %c0_i32_0 = arith.constant 0 : i32
    %c0_i32_1 = arith.constant 0 : i32
    return %c0_i32, %c0_i32_0 : i32, i32
  }
  func.func @transform_1(%arg0: i32) -> (i32, i32) {
    %c0_i32 = arith.constant 0 : i32
    %c0_i32_0 = arith.constant 0 : i32
    %c0_i32_1 = arith.constant 0 : i32
    return %c0_i32, %c0_i32_0 : i32, i32
  }
  func.func @transform_2(%arg0: i32) -> (i32, i32) {
    %c0_i32 = arith.constant 0 : i32
    %c0_i32_0 = arith.constant 0 : i32
    %c0_i32_1 = arith.constant 0 : i32
    return %c0_i32, %c0_i32_0 : i32, i32
  }
  func.func @transform_3(%arg0: i32) -> (i32, i32) {
    %c0_i32 = arith.constant 0 : i32
    %c0_i32_0 = arith.constant 0 : i32
    %c0_i32_1 = arith.constant 0 : i32
    return %c0_i32, %c0_i32_0 : i32, i32
  }
  func.func @transform_4(%arg0: i32) -> (i32, i32) {
    %c0_i32 = arith.constant 0 : i32
    %c0_i32_0 = arith.constant 0 : i32
    %c0_i32_1 = arith.constant 0 : i32
    return %c0_i32, %c0_i32_0 : i32, i32
  }
  func.func @transform_5(%arg0: i32) -> (i32, i32) {
    %c0_i32 = arith.constant 0 : i32
    %c0_i32_0 = arith.constant 0 : i32
    %c0_i32_1 = arith.constant 0 : i32
    return %c0_i32, %c0_i32_0 : i32, i32
  }
}

</mosaic_0001>

<llo_original>
// kernel: tpu_custom_call.1
$region0: #{tpu_custom_call.1}
  #allocation0 [shape = 'u32[]', space=smem, size = 0x4, offset = 0x4, fixed_abs, tag = 'smem constant byte address 0x4 - core index']
  #allocation1 [shape = 'u32[144,128]{1,0:T(1,128)}', space=vmem, size = 0x12000, scoped, tag = 'internal scratch']
  %s0 = inlined_call_operand.vmem [shape: f32[16,32], index: 0, kind: input, shape index: {}]
  %s1 = inlined_call_operand.vmem [shape: f32[32,64], index: 1, kind: input, shape index: {}]
  %s2 = inlined_call_operand.vmem [shape: f32[1,64], index: 2, kind: input, shape index: {}]
  %s3 = inlined_call_operand.vmem [shape: f32[64,4], index: 3, kind: input, shape index: {}]
  %s4 = inlined_call_operand.vmem [shape: f32[1,4], index: 4, kind: input, shape index: {}]
  %s5 = inlined_call_operand.vmem [shape: f32[16,4], index: 5, kind: output, shape index: {}]
  %s6 = sld [smem:[#allocation0]]
  $region30: #{tpu_custom_call.1} parent=0
    _
  %s8 = ssub.s32 1, %s6
  %s9 = scalar_select 0, %s8, %s6
  // Predicated region
  $region2: #{tpu_custom_call.1} parent=0 // pred_check
    _
  $region3: #{tpu_custom_call.1} parent=0 // pred_check_branch
    %11 = sbr.rel (0) target = $region5
  $region4: #{tpu_custom_call.1} parent=0 // pred_region
    _
  $region5: #{tpu_custom_call.1} parent=0 // pred_fallthru
    _
  // Predicated region
  $region6: #{tpu_custom_call.1} parent=0 // pred_check
    _
  $region7: #{tpu_custom_call.1} parent=0 // pred_check_branch
    %13 = sbr.rel (0) target = $region9
  $region8: #{tpu_custom_call.1} parent=0 // pred_region
    _
  $region9: #{tpu_custom_call.1} parent=0 // pred_fallthru
    _
  // Predicated region
  $region10: #{tpu_custom_call.1} parent=0 // pred_check
    _
  $region11: #{tpu_custom_call.1} parent=0 // pred_check_branch
    %15 = sbr.rel (0) target = $region13
  $region12: #{tpu_custom_call.1} parent=0 // pred_region
    _
  $region13: #{tpu_custom_call.1} parent=0 // pred_fallthru
    _
  // Predicated region
  $region14: #{tpu_custom_call.1} parent=0 // pred_check
    _
  $region15: #{tpu_custom_call.1} parent=0 // pred_check_branch
    %17 = sbr.rel (0) target = $region17
  $region16: #{tpu_custom_call.1} parent=0 // pred_region
    _
  $region17: #{tpu_custom_call.1} parent=0 // pred_fallthru
    _
  // Predicated region
  $region18: #{tpu_custom_call.1} parent=0 // pred_check
    _
  $region19: #{tpu_custom_call.1} parent=0 // pred_check_branch
    %19 = sbr.rel (0) target = $region21
  $region20: #{tpu_custom_call.1} parent=0 // pred_region
    _
  $region21: #{tpu_custom_call.1} parent=0 // pred_fallthru
    _
  %v20 = vld [vmem:[%s0] sm:$0xff]
  %v21 = vld [vmem:[%s0 + $0x8] sm:$0xff]
  %v22 = vld [vmem:[%s1] sm:$0xff]
  %v23 = vld [vmem:[%s1 + $0x8] sm:$0xff]
  %v24 = vld [vmem:[%s1 + $0x10] sm:$0xff]
  %v25 = vld [vmem:[%s1 + $0x18] sm:$0xff]
  %v26 = vld [vmem:[%s2] sm:$0x1]
  %v28 = vlaneseq
  %v29 = vshrl.u32 %v28, 7
  %v30 = vsub.s32 0, %v29
  %v31 = vrot.slane %v26, %v30
  %vm33 = vcmask 261120
  %v35 = vsel %vm33, %v20, 0
  %v38 = vsel %vm33, %v21, 0
  %40 = vmatprep.subr.mxu0 0.0
  %41 = vmatpush1.msra.mxu0 %v22
  %42 = vmatprep.subr.mxu0 0.0
  %43 = vmatpush1.msra.mxu0 %v23
  %44 = vmatprep.subr.mxu0 0.0
  %45 = vmatpush1.msra.mxu0 %v24
  %46 = vmatprep.subr.mxu0 0.0
  %47 = vmatpush1.msra.mxu0 %v25
  %48 = vmatprep.subr.mxu0 0.0
  %49 = vmatpush1.msra.mxu0 0.0
  %50 = vmatprep.subr.mxu0 0.0
  %51 = vmatpush1.msra.mxu0 0.0
  %52 = vmatprep.subr.mxu0 0.0
  %53 = vmatpush1.msra.mxu0 0.0
  %54 = vmatprep.subr.mxu0 0.0
  %55 = vmatpush1.msra.mxu0 0.0
  %56 = vmatprep.subr.mxu0 0.0
  %57 = vmatpush1.msra.mxu0 0.0
  %58 = vmatprep.subr.mxu0 0.0
  %59 = vmatpush1.msra.mxu0 0.0
  %60 = vmatprep.subr.mxu0 0.0
  %61 = vmatpush1.msra.mxu0 0.0
  %62 = vmatprep.subr.mxu0 0.0
  %63 = vmatpush1.msra.mxu0 0.0
  %64 = vmatprep.subr.mxu0 0.0
  %65 = vmatpush1.msra.mxu0 0.0
  %66 = vmatprep.subr.mxu0 0.0
  %67 = vmatpush1.msra.mxu0 0.0
  %68 = vmatprep.subr.mxu0 0.0
  %69 = vmatpush1.msra.mxu0 0.0
  %70 = vmatprep.subr.mxu0 0.0
  %71 = vmatpush1.msra.mxu0 0.0
  %72 = vmatprep.subr.mxu0 0.0
  %73 = vmatpush1.msra.mxu0 0.0
  %74 = vmatprep.subr.mxu0 0.0
  %75 = vmatpush1.msra.mxu0 0.0
  %76 = vmatprep.subr.mxu0 0.0
  %77 = vmatpush1.msra.mxu0 0.0
  %78 = vmatprep.subr.mxu0 0.0
  %79 = vmatpush1.msra.mxu0 0.0
  %80 = vmatprep.subr.mxu0 0.0
  %81 = vmatpush1.msra.mxu0 0.0
  %82 = vmatprep.subr.mxu0 0.0
  %83 = vmatpush1.msra.mxu0 0.0
  %84 = vmatprep.subr.mxu0 0.0
  %85 = vmatpush1.msra.mxu0 0.0
  %86 = vmatprep.subr.mxu0 0.0
  %87 = vmatpush1.msra.mxu0 0.0
  %88 = vmatprep.subr.mxu0 0.0
  %89 = vmatpush1.msra.mxu0 0.0
  %90 = vmatprep.subr.mxu0 0.0
  %91 = vmatpush1.msra.mxu0 0.0
  %92 = vmatprep.subr.mxu0 0.0
  %93 = vmatpush1.msra.mxu0 0.0
  %94 = vmatprep.subr.mxu0 0.0
  %95 = vmatpush1.msra.mxu0 0.0
  %96 = vmatprep.subr.mxu0 0.0
  %97 = vmatpush1.msra.mxu0 0.0
  %98 = vmatprep.subr.mxu0 0.0
  %99 = vmatpush1.msra.mxu0 0.0
  %100 = vmatprep.subr.mxu0 0.0
  %101 = vmatpush1.msra.mxu0 0.0
  %102 = vmatprep.subr.mxu0 0.0
  %103 = vmatpush1.msra.mxu0 0.0
  %104 = vmatprep.mubr.f32.mxu0 0.0
  %105 = vmatmul.mubr.f32.gmra.mrb[0].mxu0 %v35
  %v106 = vpop.f32.mrb[0].mxu0
  %v107 = vadd.f32 %v31, %v106
  %v108 = vpop.f32.mrb[0].mxu0
  %109 = vmatprep.mubr.f32.mxu0 0.0
  %110 = vmatmul.mubr.f32.gmra.mrb[0].mxu0 %v38
  %v111 = vpop.f32.mrb[0].mxu0
  %v112 = vadd.f32 %v31, %v111
  %v113 = vpop.f32.mrb[0].mxu0
  %114 = vdwg.mxu0
  %v115 = vtanh.pop %v107
  %v116 = vtanh.pop %v112
  %v117 = vld [vmem:[%s3] sm:$0xff]
  %v118 = vld [vmem:[%s3 + $0x8] sm:$0xff]
  %v119 = vld [vmem:[%s3 + $0x10] sm:$0xff]
  %v120 = vld [vmem:[%s3 + $0x18] sm:$0xff]
  %v121 = vld [vmem:[%s3 + $0x20] sm:$0xff]
  %v122 = vld [vmem:[%s3 + $0x28] sm:$0xff]
  %v123 = vld [vmem:[%s3 + $0x30] sm:$0xff]
  %v124 = vld [vmem:[%s3 + $0x38] sm:$0xff]
  %v125 = vld [vmem:[%s4] sm:$0x1]
  %v127 = vlaneseq
  %v128 = vshrl.u32 %v127, 7
  %v129 = vsub.s32 0, %v128
  %v130 = vrot.slane %v125, %v129
  %vm132 = vcmask 523264
  %v134 = vsel %vm132, %v115, 0
  %v137 = vsel %vm132, %v116, 0
  %139 = vmatprep.subr.mxu0 0.0
  %140 = vmatpush1.msra.mxu0 %v117
  %141 = vmatprep.subr.mxu0 0.0
  %142 = vmatpush1.msra.mxu0 %v118
  %143 = vmatprep.subr.mxu0 0.0
  %144 = vmatpush1.msra.mxu0 %v119
  %145 = vmatprep.subr.mxu0 0.0
  %146 = vmatpush1.msra.mxu0 %v120
  %147 = vmatprep.subr.mxu0 0.0
  %148 = vmatpush1.msra.mxu0 %v121
  %149 = vmatprep.subr.mxu0 0.0
  %150 = vmatpush1.msra.mxu0 %v122
  %151 = vmatprep.subr.mxu0 0.0
  %152 = vmatpush1.msra.mxu0 %v123
  %153 = vmatprep.subr.mxu0 0.0
  %154 = vmatpush1.msra.mxu0 %v124
  %155 = vmatprep.subr.mxu0 0.0
  %156 = vmatpush1.msra.mxu0 0.0
  %157 = vmatprep.subr.mxu0 0.0
  %158 = vmatpush1.msra.mxu0 0.0
  %159 = vmatprep.subr.mxu0 0.0
  %160 = vmatpush1.msra.mxu0 0.0
  %161 = vmatprep.subr.mxu0 0.0
  %162 = vmatpush1.msra.mxu0 0.0
  %163 = vmatprep.subr.mxu0 0.0
  %164 = vmatpush1.msra.mxu0 0.0
  %165 = vmatprep.subr.mxu0 0.0
  %166 = vmatpush1.msra.mxu0 0.0
  %167 = vmatprep.subr.mxu0 0.0
  %168 = vmatpush1.msra.mxu0 0.0
  %169 = vmatprep.subr.mxu0 0.0
  %170 = vmatpush1.msra.mxu0 0.0
  %171 = vmatprep.subr.mxu0 0.0
  %172 = vmatpush1.msra.mxu0 0.0
  %173 = vmatprep.subr.mxu0 0.0
  %174 = vmatpush1.msra.mxu0 0.0
  %175 = vmatprep.subr.mxu0 0.0
  %176 = vmatpush1.msra.mxu0 0.0
  %177 = vmatprep.subr.mxu0 0.0
  %178 = vmatpush1.msra.mxu0 0.0
  %179 = vmatprep.subr.mxu0 0.0
  %180 = vmatpush1.msra.mxu0 0.0
  %181 = vmatprep.subr.mxu0 0.0
  %182 = vmatpush1.msra.mxu0 0.0
  %183 = vmatprep.subr.mxu0 0.0
  %184 = vmatpush1.msra.mxu0 0.0
  %185 = vmatprep.subr.mxu0 0.0
  %186 = vmatpush1.msra.mxu0 0.0
  %187 = vmatprep.subr.mxu0 0.0
  %188 = vmatpush1.msra.mxu0 0.0
  %189 = vmatprep.subr.mxu0 0.0
  %190 = vmatpush1.msra.mxu0 0.0
  %191 = vmatprep.subr.mxu0 0.0
  %192 = vmatpush1.msra.mxu0 0.0
  %193 = vmatprep.subr.mxu0 0.0
  %194 = vmatpush1.msra.mxu0 0.0
  %195 = vmatprep.subr.mxu0 0.0
  %196 = vmatpush1.msra.mxu0 0.0
  %197 = vmatprep.subr.mxu0 0.0
  %198 = vmatpush1.msra.mxu0 0.0
  %199 = vmatprep.subr.mxu0 0.0
  %200 = vmatpush1.msra.mxu0 0.0
  %201 = vmatprep.subr.mxu0 0.0
  %202 = vmatpush1.msra.mxu0 0.0
  %203 = vmatprep.mubr.f32.mxu0 0.0
  %204 = vmatmul.mubr.f32.gmra.mrb[0].mxu0 %v134
  %v205 = vpop.f32.mrb[0].mxu0
  %v206 = vadd.f32 %v130, %v205
  %v207 = vpop.f32.mrb[0].mxu0
  %208 = vmatprep.mubr.f32.mxu0 0.0
  %209 = vmatmul.mubr.f32.gmra.mrb[0].mxu0 %v137
  %v210 = vpop.f32.mrb[0].mxu0
  %v211 = vadd.f32 %v130, %v210
  %v212 = vpop.f32.mrb[0].mxu0
  %213 = vdwg.mxu0
  %vm214 = vcmask 31744
  %215 = vst.msk [vmem:[%s5] sm:$0xff] %vm214, %v206
  %216 = vst.msk [vmem:[%s5 + $0x8] sm:$0xff] %vm214, %v211
  // Predicated region
  $region22: #{tpu_custom_call.1} parent=0 // pred_check
    _
  $region23: #{tpu_custom_call.1} parent=0 // pred_check_branch
    %218 = sbr.rel (0) target = $region25
  $region24: #{tpu_custom_call.1} parent=0 // pred_region
    _
  $region25: #{tpu_custom_call.1} parent=0 // pred_fallthru
    _
  // Predicated region
  $region26: #{tpu_custom_call.1} parent=0 // pred_check
    _
  $region27: #{tpu_custom_call.1} parent=0 // pred_check_branch
    %220 = sbr.rel (0) target = $region29
  $region28: #{tpu_custom_call.1} parent=0 // pred_region
    _
  $region29: #{tpu_custom_call.1} parent=0 // pred_fallthru
    _

</llo_original>
